<compile_context>
chip_gen: v6e
topology: v6e:2x2x1
jax: 0.10.0
libtpu: 0.0.40
codegen_flags: <defaults>
</compile_context>

<pallas_src>
import jax
import jax.numpy as jnp
from jax.experimental import pallas as pl
from jax.experimental.pallas import tpu as pltpu


# ----------------------------------------------------------------------------
# Kernel
# ----------------------------------------------------------------------------
def activation_unit_kernel(hist_ref, cand_ref, w_ref, b_ref, out_ref, acc_ref):
    # hist_ref: (TB, TS, D)   cand_ref: (TB, D)   w_ref: (2, D) f32
    # b_ref: (1,) f32 in SMEM   out_ref: (TB, D)   acc_ref: (TB, D) f32 scratch
    s_idx = pl.program_id(1)

    @pl.when(s_idx == 0)
    def _():
        acc_ref[...] = jnp.zeros_like(acc_ref)

    hist = hist_ref[...]                               # (TB, TS, D), native dtype
    cand = cand_ref[...].astype(jnp.float32)           # (TB, D)
    w = w_ref[...]                                     # (2, D) f32
    bias = b_ref[0]                                    # scalar (SMEM read)

    w_cand = w[0:1, :]                                 # (1, D)  candidate part
    w_hist = w[1:2, :]                                 # (1, D)  history part

    # logits[b, s] = <cand_b, w_cand> + <hist_{b,s}, w_hist> + bias
    cand_score = jnp.sum(cand * w_cand, axis=-1, keepdims=True)              # (TB, 1)
    hist_score = jnp.sum(hist * w_hist[None].astype(hist.dtype),
                         axis=-1, dtype=jnp.float32)                         # (TB, TS)
    logits = hist_score + cand_score + bias                                  # (TB, TS)

    # attention weights (EUP sigmoid) and weighted sum over this sequence tile.
    attn = jax.nn.sigmoid(logits)                                            # (TB, TS) f32
    aw = attn.astype(hist_ref.dtype)
    # Re-read the history tile for the second pass (bounds the live range of
    # the (TB, TS, D) value across the sigmoid; avoids vreg spills for big tiles).
    acc_ref[...] += jnp.sum(aw[:, :, None] * hist_ref[...],
                            axis=1, dtype=jnp.float32)                       # (TB, D)

    @pl.when(s_idx == pl.num_programs(1) - 1)
    def _():
        out_ref[...] = acc_ref[...].astype(out_ref.dtype)


# ----------------------------------------------------------------------------
# Tile-size selection (byte-targeted, padding-aware, per-generation)
# ----------------------------------------------------------------------------
def _round_up(x, m):
    return ((x + m - 1) // m) * m


def _sublane_rows(dtype):
    itemsize = jnp.dtype(dtype).itemsize
    if itemsize >= 4:
        return 8
    return 8 * (4 // itemsize)        # 16 for 2-byte (bf16), 32 for 1-byte


def _tpu_budgets():
    """(per_buffer_target, per_buffer_cap, vmem_limit_bytes, two_tensorcores)."""
    MiB = 1024 * 1024
    vmem_cap = None
    try:
        vmem_cap = int(pltpu.get_tpu_info().vmem_capacity_bytes)
    except Exception:
        vmem_cap = None
    if vmem_cap is not None and vmem_cap >= 100 * MiB:
        # v5e / v6e: 128 MiB physical VMEM, single TensorCore per chip.
        return 8 * MiB, 20 * MiB, 80 * MiB, False
    # v7x (64 MiB VMEM, 2 TensorCores) or unknown: stay conservative on VMEM.
    return 10 * MiB, 12 * MiB, 52 * MiB, True


def _choose_blocks(B, S, D, hist_dtype, cand_dtype):
    itemsize = jnp.dtype(hist_dtype).itemsize
    sub_h = _sublane_rows(hist_dtype)
    sub_b = max(_sublane_rows(cand_dtype), sub_h)
    d_pad = _round_up(D, 128)
    target, cap, vmem_limit, two_cores = _tpu_budgets()

    # Real (padded) VMEM bytes of one batch row of history over the full sequence.
    row_bytes = _round_up(S, sub_h) * d_pad * itemsize

    if min(B, sub_b) * row_bytes > cap:
        # Even the smallest legal batch tile over the full sequence blows the
        # per-buffer budget: tile the sequence too (accumulate in scratch).
        block_b = min(B, sub_b)
        seq_rows = max(1, cap // (block_b * d_pad * itemsize))
        block_s = max(sub_h, (seq_rows // sub_h) * sub_h)
        block_s = min(block_s, _round_up(S, sub_h))
    else:
        block_s = S
        want_rows = max(sub_b, int(target // row_bytes))
        block_b = max(sub_b, (want_rows // sub_b) * sub_b)
        if block_b >= B:
            block_b = B
        elif two_cores:
            # 2 TensorCores: prefer an even number of batch tiles.
            n = -(-B // block_b)
            if n > 1 and n % 2 == 1:
                nb = _round_up(-(-B // (n + 1)), sub_b)
                if nb < B and (-(-B // nb)) % 2 == 0:
                    block_b = nb
        if two_cores and block_b == B and B > sub_b:
            # Single-step grid would use only 1 of 2 TensorCores; split when
            # the halves are still DMA-efficient (>= ~256 KiB each).
            nb = _round_up(-(-B // 2), sub_b)
            if nb < B and nb * row_bytes >= 256 * 1024:
                block_b = nb
    return block_b, block_s, vmem_limit


# ----------------------------------------------------------------------------
# Wrapper
# ----------------------------------------------------------------------------
def activation_unit(history, candidate, weight, bias, *, block_b=None, block_s=None):
    """history: (B, S, D), candidate: (B, D), weight: (1, 2D), bias: (1,)."""
    B, S, D = history.shape
    assert candidate.shape == (B, D)
    assert weight.shape == (1, 2 * D)

    auto_bb, auto_bs, vmem_limit = _choose_blocks(
        B, S, D, history.dtype, candidate.dtype)
    if block_b is None:
        block_b = auto_bb
    if block_s is None:
        block_s = auto_bs

    sub_h = _sublane_rows(history.dtype)
    sub_b = max(_sublane_rows(candidate.dtype), sub_h)

    # Pad awkward B / S up to a multiple of the tile instead of shrinking tiles.
    B_pad = B if block_b >= B else _round_up(B, block_b)
    if block_b >= B:
        block_b = B
    S_pad = S if block_s >= S else _round_up(S, block_s)
    if block_s >= S:
        block_s = S

    # (8,128)-rule sanity: tiled dims must be sublane multiples (full dims are ok).
    assert block_b == B_pad or block_b % sub_b == 0
    assert block_s == S_pad or block_s % sub_h == 0

    if B_pad != B or S_pad != S:
        history = jnp.pad(history, ((0, B_pad - B), (0, S_pad - S), (0, 0)))
    if B_pad != B:
        candidate = jnp.pad(candidate, ((0, B_pad - B), (0, 0)))

    # Lane-dense weight layout: row 0 multiplies the candidate part,
    # row 1 multiplies the history part (matches cat([cand, history]) order).
    w2 = weight.reshape(2, D).astype(jnp.float32)          # (2, D)
    b = bias.reshape(1).astype(jnp.float32)                # (1,) -> SMEM

    grid = (B_pad // block_b, S_pad // block_s)

    itemsize = jnp.dtype(history.dtype).itemsize
    flops = int(4 * B_pad * S_pad * D + 2 * B_pad * D)
    bytes_accessed = int((B_pad * S_pad * D + 2 * B_pad * D) * itemsize
                         + 2 * D * 4 + 4)

    out = pl.pallas_call(
        activation_unit_kernel,
        out_shape=jax.ShapeDtypeStruct((B_pad, D), history.dtype),
        grid_spec=pltpu.PrefetchScalarGridSpec(
            num_scalar_prefetch=0,
            grid=grid,
            in_specs=[
                pl.BlockSpec((block_b, block_s, D), lambda i, s: (i, s, 0)),  # history
                pl.BlockSpec((block_b, D), lambda i, s: (i, 0)),              # candidate
                pl.BlockSpec((2, D), lambda i, s: (0, 0)),                    # weight (lane-dense)
                pl.BlockSpec(memory_space=pltpu.MemorySpace.SMEM),            # bias scalar
            ],
            out_specs=pl.BlockSpec((block_b, D), lambda i, s: (i, 0)),
            scratch_shapes=[pltpu.VMEM((block_b, D), jnp.float32)],
        ),
        compiler_params=pltpu.CompilerParams(
            dimension_semantics=("parallel", "arbitrary"),
            vmem_limit_bytes=vmem_limit,
        ),
        cost_estimate=pl.CostEstimate(
            flops=flops, transcendentals=int(B_pad * S_pad),
            bytes_accessed=bytes_accessed),
    )(history, candidate, w2, b)

    return out if B_pad == B else out[:B]


# ----------------------------------------------------------------------------
# Pure-JAX reference
# ----------------------------------------------------------------------------
def activation_unit_ref(history, candidate, weight, bias):
    B, S, D = history.shape
    cand = jnp.broadcast_to(candidate[:, None, :], (B, S, D))
    cat = jnp.concatenate([cand, history], axis=2)                    # (B, S, 2D)
    logits = jnp.einsum('bsk,ok->bso', cat, weight) + bias            # (B, S, 1)
    w = jax.nn.sigmoid(logits)                                        # (B, S, 1)
    out = jnp.einsum('bso,bsd->bod', w, history)[:, 0, :]             # (B, D)
    return out


if __name__ == "__main__":
    hidden = 32
    D = 2 * hidden        # embedding dim of history / candidate
    B, S = 2, 8

    key = jax.random.PRNGKey(0)
    k1, k2, k3, k4, k5, k6 = jax.random.split(key, 6)

    # --- Test 1: module-faithful small shapes, f32, auto tiling ---------------
    history = jax.random.normal(k1, (B, S, D), dtype=jnp.float32)
    candidate = jax.random.normal(k2, (B, D), dtype=jnp.float32)
    # nn.Linear(hidden*4, 1): weight (1, 4*hidden) = (1, 2D), bias (1,)
    weight = jax.random.normal(k3, (1, 2 * D), dtype=jnp.float32) * 0.05
    bias = jax.random.normal(k4, (1,), dtype=jnp.float32) * 0.05

    out = jax.block_until_ready(activation_unit(history, candidate, weight, bias))
    ref = activation_unit_ref(history, candidate, weight, bias)
    assert out.shape == (B, D)
    assert jnp.allclose(out, ref, atol=1e-5, rtol=1e-5), "mismatch vs reference (test 1)"

    # --- Test 2: exercise multi-tile grid + B/S padding paths (forced blocks) -
    B2, S2, D2 = 20, 24, 64
    history2 = jax.random.normal(k5, (B2, S2, D2), dtype=jnp.float32)
    candidate2 = jax.random.normal(k6, (B2, D2), dtype=jnp.float32)
    weight2 = jax.random.normal(k3, (1, 2 * D2), dtype=jnp.float32) * 0.05
    out2 = jax.block_until_ready(
        activation_unit(history2, candidate2, weight2, bias, block_b=8, block_s=16))
    ref2 = activation_unit_ref(history2, candidate2, weight2, bias)
    assert out2.shape == (B2, D2)
    assert jnp.allclose(out2, ref2, atol=1e-4, rtol=1e-4), "mismatch vs reference (test 2)"

    # --- Test 3: bf16 inputs, auto tiling --------------------------------------
    history3 = history2.astype(jnp.bfloat16)
    candidate3 = candidate2.astype(jnp.bfloat16)
    out3 = jax.block_until_ready(activation_unit(history3, candidate3, weight2, bias))
    ref3 = activation_unit_ref(history3.astype(jnp.float32),
                               candidate3.astype(jnp.float32), weight2, bias)
    assert out3.shape == (B2, D2)
    assert jnp.allclose(out3.astype(jnp.float32), ref3, atol=0.25, rtol=0.1), \
        "mismatch vs reference (test 3, bf16)"

    print("KERNEL_OK")
</pallas_src>

<mosaic_0001>
module attributes {stable_mosaic.version = 11 : i64} {
  func.func @activation_unit_kernel(%arg0: i32, %arg1: i32, %arg2: memref<2x8x64xf32, #tpu.memory_space<vmem>>, %arg3: memref<2x64xf32, #tpu.memory_space<vmem>>, %arg4: memref<2x64xf32, #tpu.memory_space<vmem>>, %arg5: memref<1xf32, #tpu.memory_space<smem>>, %arg6: memref<2x64xf32, #tpu.memory_space<vmem>>, %arg7: memref<2x64xf32, #tpu.memory_space<vmem>>) attributes {dimension_semantics = [#tpu.dimension_semantics<parallel>, #tpu.dimension_semantics<arbitrary>], iteration_bounds = array<i64: 1, 1>, scalar_prefetch = 0 : i64, scratch_operands = 1 : i64, tpu.core_type = #tpu.core_type<tc>, window_params = [{transform_indices = @transform_0, window_bounds = array<i64: 2, 8, 64>}, {transform_indices = @transform_1, window_bounds = array<i64: 2, 64>}, {pipeline_mode = #tpu.pipeline_mode<synchronous>, transform_indices = @transform_2, window_bounds = array<i64: 2, 64>}, {transform_indices = @transform_3, window_bounds = array<i64: 1>}, {transform_indices = @transform_4, window_bounds = array<i64: 2, 64>}]} {
    %c0_i32 = arith.constant 0 : i32
    %0 = arith.cmpi eq, %arg1, %c0_i32 : i32
    %1 = arith.extui %0 : i1 to i32
    %c0_i32_0 = arith.constant 0 : i32
    %2 = arith.cmpi ne, %1, %c0_i32_0 : i32
    scf.if %2 {
      %cst_20 = arith.constant 0.000000e+00 : f32
      %37 = vector.broadcast %cst_20 : f32 to vector<2x64xf32>
      %c0_21 = arith.constant 0 : index
      %c0_22 = arith.constant 0 : index
      %38 = vector.load %arg7[%c0_21, %c0_22] : memref<2x64xf32, #tpu.memory_space<vmem>>, vector<2x64xf32>
      tpu.vector_store %arg7[%c0_21, %c0_22], %37 {strides = array<i32>} : memref<2x64xf32, #tpu.memory_space<vmem>>, vector<2x64xf32>,
    } else {
    }
    %c0 = arith.constant 0 : index
    %c0_1 = arith.constant 0 : index
    %c0_2 = arith.constant 0 : index
    %3 = vector.load %arg2[%c0, %c0_1, %c0_2] : memref<2x8x64xf32, #tpu.memory_space<vmem>>, vector<2x8x64xf32>
    %c0_3 = arith.constant 0 : index
    %c0_4 = arith.constant 0 : index
    %4 = vector.load %arg3[%c0_3, %c0_4] : memref<2x64xf32, #tpu.memory_space<vmem>>, vector<2x64xf32>
    %c0_5 = arith.constant 0 : index
    %c0_6 = arith.constant 0 : index
    %5 = vector.load %arg4[%c0_5, %c0_6] : memref<2x64xf32, #tpu.memory_space<vmem>>, vector<2x64xf32>
    %c0_7 = arith.constant 0 : index
    %6 = memref.load %arg5[%c0_7] : memref<1xf32, #tpu.memory_space<smem>>
    %7 = vector.extract_strided_slice %5 {offsets = [0, 0], sizes = [1, 64], strides = [1, 1]} : vector<2x64xf32> to vector<1x64xf32>
    %8 = vector.extract_strided_slice %5 {offsets = [1, 0], sizes = [1, 64], strides = [1, 1]} : vector<2x64xf32> to vector<1x64xf32>
    %9 = vector.broadcast %7 : vector<1x64xf32> to vector<2x64xf32>
    %10 = arith.mulf %4, %9 : vector<2x64xf32>
    %cst = arith.constant dense<0.000000e+00> : vector<2xf32>
    %11 = vector.multi_reduction <add>, %10, %cst [1] : vector<2x64xf32> to vector<2xf32>
    %12 = vector.shape_cast %11 : vector<2xf32> to vector<2x1xf32>
    %13 = vector.shape_cast %8 : vector<1x64xf32> to vector<1x1x64xf32>
    %14 = vector.broadcast %13 : vector<1x1x64xf32> to vector<2x8x64xf32>
    %15 = arith.mulf %3, %14 : vector<2x8x64xf32>
    %cst_8 = arith.constant dense<0.000000e+00> : vector<2x8xf32>
    %16 = vector.multi_reduction <add>, %15, %cst_8 [2] : vector<2x8x64xf32> to vector<2x8xf32>
    %17 = vector.broadcast %12 : vector<2x1xf32> to vector<2x8xf32>
    %18 = arith.addf %16, %17 : vector<2x8xf32>
    %19 = vector.broadcast %6 : f32 to vector<2x8xf32>
    %20 = arith.addf %18, %19 : vector<2x8xf32>
    %21 = arith.negf %20 : vector<2x8xf32>
    %22 = math.exp %21 : vector<2x8xf32>
    %cst_9 = arith.constant 1.000000e+00 : f32
    %23 = vector.broadcast %cst_9 : f32 to vector<2x8xf32>
    %24 = arith.addf %23, %22 : vector<2x8xf32>
    %25 = arith.divf %23, %24 : vector<2x8xf32>
    %c0_10 = arith.constant 0 : index
    %c0_11 = arith.constant 0 : index
    %26 = vector.load %arg7[%c0_10, %c0_11] : memref<2x64xf32, #tpu.memory_space<vmem>>, vector<2x64xf32>
    %27 = vector.shape_cast %25 : vector<2x8xf32> to vector<2x8x1xf32>
    %c0_12 = arith.constant 0 : index
    %c0_13 = arith.constant 0 : index
    %c0_14 = arith.constant 0 : index
    %28 = vector.load %arg2[%c0_12, %c0_13, %c0_14] : memref<2x8x64xf32, #tpu.memory_space<vmem>>, vector<2x8x64xf32>
    %29 = vector.broadcast %27 : vector<2x8x1xf32> to vector<2x8x64xf32>
    %30 = arith.mulf %29, %28 : vector<2x8x64xf32>
    %cst_15 = arith.constant dense<0.000000e+00> : vector<2x64xf32>
    %31 = vector.multi_reduction <add>, %30, %cst_15 [1] : vector<2x8x64xf32> to vector<2x64xf32>
    %32 = arith.addf %26, %31 : vector<2x64xf32>
    %c0_16 = arith.constant 0 : index
    %c0_17 = arith.constant 0 : index
    %33 = vector.load %arg7[%c0_16, %c0_17] : memref<2x64xf32, #tpu.memory_space<vmem>>, vector<2x64xf32>
    tpu.vector_store %arg7[%c0_16, %c0_17], %32 {strides = array<i32>} : memref<2x64xf32, #tpu.memory_space<vmem>>, vector<2x64xf32>,
    %c0_i32_18 = arith.constant 0 : i32
    %34 = arith.cmpi eq, %arg1, %c0_i32_18 : i32
    %35 = arith.extui %34 : i1 to i32
    %c0_i32_19 = arith.constant 0 : i32
    %36 = arith.cmpi ne, %35, %c0_i32_19 : i32
    scf.if %36 {
      %c0_20 = arith.constant 0 : index
      %c0_21 = arith.constant 0 : index
      %37 = vector.load %arg7[%c0_20, %c0_21] : memref<2x64xf32, #tpu.memory_space<vmem>>, vector<2x64xf32>
      %c0_22 = arith.constant 0 : index
      %c0_23 = arith.constant 0 : index
      %38 = vector.load %arg6[%c0_22, %c0_23] : memref<2x64xf32, #tpu.memory_space<vmem>>, vector<2x64xf32>
      tpu.vector_store %arg6[%c0_22, %c0_23], %37 {strides = array<i32>} : memref<2x64xf32, #tpu.memory_space<vmem>>, vector<2x64xf32>,
    } else {
    }
    return
  }
  func.func @transform_0(%arg0: i32, %arg1: i32) -> (i32, i32, i32) {
    %c0_i32 = arith.constant 0 : i32
    %c0_i32_0 = arith.constant 0 : i32
    return %arg0, %arg1, %c0_i32 : i32, i32, i32
  }
  func.func @transform_1(%arg0: i32, %arg1: i32) -> (i32, i32) {
    %c0_i32 = arith.constant 0 : i32
    %c0_i32_0 = arith.constant 0 : i32
    return %arg0, %c0_i32 : i32, i32
  }
  func.func @transform_2(%arg0: i32, %arg1: i32) -> (i32, i32) {
    %c0_i32 = arith.constant 0 : i32
    %c0_i32_0 = arith.constant 0 : i32
    %c0_i32_1 = arith.constant 0 : i32
    return %c0_i32, %c0_i32_0 : i32, i32
  }
  func.func @transform_3(%arg0: i32, %arg1: i32) -> i32 {
    %c0_i32 = arith.constant 0 : i32
    %c0_i32_0 = arith.constant 0 : i32
    return %c0_i32 : i32
  }
  func.func @transform_4(%arg0: i32, %arg1: i32) -> (i32, i32) {
    %c0_i32 = arith.constant 0 : i32
    %c0_i32_0 = arith.constant 0 : i32
    return %arg0, %c0_i32 : i32, i32
  }
}

</mosaic_0001>

<llo_original>
// kernel: tpu_custom_call.1
$region0: #{tpu_custom_call.1}
  #allocation0 [shape = 'u32[]', space=smem, size = 0x4, offset = 0x4, fixed_abs, tag = 'smem constant byte address 0x4 - core index']
  #allocation1 [shape = 'u32[144,128]{1,0:T(1,128)}', space=vmem, size = 0x12000, scoped, tag = 'internal scratch']
  #allocation2 [shape = 'f32[2,64]{1,0:T(2,128)}', space=vmem, size = 0x400, scoped, tag = 'scratch operand']
  #allocation3 [shape = 'f32[1]{0:T(128)S(6)}', space=smem, size = 0x200, scoped, tag = 'scoped memory for tpu_custom_call.1']
  %s0 = inlined_call_operand.hbm [shape: f32[2,8,64], index: 0, kind: input, shape index: {}]
  %s1 = inlined_call_operand.vmem [shape: f32[2,64], index: 1, kind: input, shape index: {}]
  %s2 = inlined_call_operand.vmem [shape: f32[2,64], index: 2, kind: input, shape index: {}]
  %s3 = inlined_call_operand.<no memory space> [shape: f32[1], index: 3, kind: input, shape index: {}]
  %s4 = inlined_call_operand.hbm [shape: f32[2,64], index: 4, kind: output, shape index: {}]
  %s5 = sld [smem:[#allocation0]]
  $region38: #{tpu_custom_call.1} parent=0
    _
  %s7 = ssub.s32 1, %s5
  %s8 = scalar_select 0, %s7, %s5
  %9 = sst [smem:[#allocation3]] %s3
  $region1: #{tpu_custom_call.1} parent=0
    #allocation4 [shape = 'u8[8192]{0}', space=vmem, size = 0x2000, scoped, tag = 'input window, operand 0, single buffered']
    #allocation5 [shape = 's32[1]{0}', space=sflag, size = 0x4, scoped, tag = 'scoped memory for tpu_custom_call.1']
    #allocation6 [shape = 's32[1]{0}', space=sflag, size = 0x4, scoped, tag = 'scoped memory for tpu_custom_call.1']
    #allocation7 [shape = 'u8[1024]{0}', space=vmem, size = 0x400, scoped, tag = 'output window, operand 0, single buffered']
    %10 = vsyncpa [#allocation5], 0
    %11 = vsyncpa [#allocation6], 0
    // Predicated region
    $region2: #{tpu_custom_call.1} parent=1 // pred_check
      _
    $region3: #{tpu_custom_call.1} parent=1 // pred_check_branch
      %13 = sbr.rel (0) target = $region5
    $region4: #{tpu_custom_call.1} parent=1 // pred_region
      %s15 = ssub.s32 256, 256
      %16 = vsyncadd [#allocation5], %s15
      %s17 = sshll.u32 [#allocation4], 4
      %s18 = int_to_ptr.vmem [resolvable:$true] %s17
      %23 = dma.hbm_to_vmem [thread:$0]  %s0, 256, %s18, [#allocation5], 128, 128, 8
    $region5: #{tpu_custom_call.1} parent=1 // pred_fallthru
      _
    // Predicated region
    $region6: #{tpu_custom_call.1} parent=1 // pred_check
      _
    $region7: #{tpu_custom_call.1} parent=1 // pred_check_branch
      %25 = sbr.rel (0) target = $region9
    $region8: #{tpu_custom_call.1} parent=1 // pred_region
      _
    $region9: #{tpu_custom_call.1} parent=1 // pred_fallthru
      _
    // Predicated region
    $region10: #{tpu_custom_call.1} parent=1 // pred_check
      _
    $region11: #{tpu_custom_call.1} parent=1 // pred_check_branch
      %27 = sbr.rel (0) target = $region13
    $region12: #{tpu_custom_call.1} parent=1 // pred_region
      _
    $region13: #{tpu_custom_call.1} parent=1 // pred_fallthru
      _
    // Predicated region
    $region14: #{tpu_custom_call.1} parent=1 // pred_check
      _
    $region15: #{tpu_custom_call.1} parent=1 // pred_check_branch
      %29 = sbr.rel (0) target = $region17
    $region16: #{tpu_custom_call.1} parent=1 // pred_region
      _
    $region17: #{tpu_custom_call.1} parent=1 // pred_fallthru
      _
    // Predicated region
    $region18: #{tpu_custom_call.1} parent=1 // pred_check
      _
    $region19: #{tpu_custom_call.1} parent=1 // pred_check_branch
      %31 = sbr.rel (0) target = $region21
    $region20: #{tpu_custom_call.1} parent=1 // pred_region
      %32 = dma.done [#allocation5], 256
    $region21: #{tpu_custom_call.1} parent=1 // pred_fallthru
      _
    %p33 = scmp.eq.s32.totalorder 0, 0
    // Predicated region
    $region22: #{tpu_custom_call.1} parent=1 // pred_check
      %p34 = pneg %p33
    $region23: #{tpu_custom_call.1} parent=1 // pred_check_branch
      %36 = sbr.rel (%p34) target = $region25
    $region24: #{tpu_custom_call.1} parent=1 // pred_region
      %vm37 = vcmask 517120
      %38 = vst.msk [vmem:[#allocation2] sm:$0x3] %vm37, 0.0
    $region25: #{tpu_custom_call.1} parent=1 // pred_fallthru
      _
    %v39 = vld [vmem:[#allocation4] sm:$0xff]
    %v40 = vld [vmem:[#allocation4 + $0x8] sm:$0xff]
    %v41 = vld [vmem:[%s1] sm:$0x3]
    %v42 = vld [vmem:[%s2] sm:$0x3]
    %s43 = sld [smem:[#allocation3]]
    %v44 = vlaneseq
    %v45 = vshrl.u32 %v44, 7
    %v46 = vsub.s32 0, %v45
    %v47 = vrot.slane %v42, %v46
    %v48 = vmul.f32 %v41, %v47
    %vm49 = vcmask 517120
    %v50 = vsel %vm49, %v48, 0.0
    %51 = vadd.xlane.f32.xlu0 %v50
    %v52 = vpop.xlane.xlu0 %51
    %v53 = vlaneseq
    %v54 = vshrl.u32 %v53, 7
    %v55 = vsub.s32 1, %v54
    %v56 = vrot.slane %v42, %v55
    %v57 = vmul.f32 %v39, %v56
    %v58 = vmul.f32 %v40, %v56
    %vm59 = vcmask 523264
    %v60 = vsel %vm59, %v57, 0.0
    %61 = vadd.xlane.f32.xlu0 %v60
    %v62 = vpop.xlane.xlu0 %61
    %v63 = vsel %vm59, %v58, 0.0
    %64 = vadd.xlane.f32.xlu0 %v63
    %v65 = vpop.xlane.xlu0 %64
    %v67 = vlaneseq
    %v68 = vshrl.u32 %v67, 7
    %v69 = vsub.s32 0, %v68
    %v70 = vrot.slane %v52, %v69
    %v71 = vlaneseq
    %v72 = vshrl.u32 %v71, 7
    %v73 = vsub.s32 1, %v72
    %v74 = vrot.slane %v52, %v73
    %v77 = vadd.f32 %v62, %v70
    %v78 = vadd.f32 %v65, %v74
    %v79 = vstv %s43
    %v80 = vadd.f32 %v77, %v79
    %v81 = vadd.f32 %v78, %v79
    %v82 = vxor.u32 %v80, 2147483648
    %v83 = vxor.u32 %v81, 2147483648
    %v84 = vmul.f32 %v82, 1.442695
    %v85 = vpow.pop %v84
    %v86 = vmul.f32 %v83, 1.442695
    %v87 = vpow.pop %v86
    %v88 = vadd.f32 %v85, 1.0
    %v89 = vadd.f32 %v87, 1.0
    %v90 = vrcp.pop %v88
    %v91 = vmul.f32 1.0, %v90
    %v92 = vrcp.pop %v89
    %v93 = vmul.f32 1.0, %v92
    %v94 = vld [vmem:[#allocation2] sm:$0x3]
    %96 = vset.pattern.permute.xlu0 0
    %97 = vperm.xlu0 %96, %v91
    %v98 = vpop.permute.xlu0 %97
    %101 = vset.pattern.permute.xlu0 0
    %102 = vperm.xlu0 %101, %v93
    %v103 = vpop.permute.xlu0 %102
    %v105 = vmul.f32 %v98, %v39
    %v106 = vmul.f32 %v103, %v40
    %v107 = vsel %vm59, %v105, 0.0
    %v108 = vrot.slane %v107, 4
    %v109 = vadd.f32 %v107, %v108
    %v110 = vrot.slane %v109, 2
    %v111 = vadd.f32 %v109, %v110
    %v112 = vrot.slane %v111, 1
    %v113 = vadd.f32 %v111, %v112
    %v114 = vsel %vm59, %v106, 0.0
    %v115 = vrot.slane %v114, 4
    %v116 = vadd.f32 %v114, %v115
    %v117 = vrot.slane %v116, 2
    %v118 = vadd.f32 %v116, %v117
    %v119 = vrot.slane %v118, 1
    %v120 = vadd.f32 %v118, %v119
    %vm123 = vcmask 1041409
    %v124 = vsel %vm123, %v120, %v113
    %v126 = vadd.f32 %v94, %v124
    %127 = vst.msk [vmem:[#allocation2] sm:$0x3] %vm49, %v126
    // Predicated region
    $region26: #{tpu_custom_call.1} parent=1 // pred_check
      %p128 = pneg %p33
    $region27: #{tpu_custom_call.1} parent=1 // pred_check_branch
      %130 = sbr.rel (%p128) target = $region29
    $region28: #{tpu_custom_call.1} parent=1 // pred_region
      %v131 = vld [vmem:[#allocation2] sm:$0x3]
      %132 = vst.msk [vmem:[#allocation7] sm:$0x3] %vm49, %v131
    $region29: #{tpu_custom_call.1} parent=1 // pred_fallthru
      _
    // Predicated region
    $region30: #{tpu_custom_call.1} parent=1 // pred_check
      _
    $region31: #{tpu_custom_call.1} parent=1 // pred_check_branch
      %134 = sbr.rel (0) target = $region33
    $region32: #{tpu_custom_call.1} parent=1 // pred_region
      %s136 = ssub.s32 32, 32
      %137 = vsyncadd [#allocation6], %s136
      %s139 = sshll.u32 [#allocation7], 4
      %s140 = int_to_ptr.vmem [resolvable:$true] %s139
      %142 = dma.vmem_to_hbm [thread:$0]  %s140, 32, %s4, [#allocation6]
    $region33: #{tpu_custom_call.1} parent=1 // pred_fallthru
      _
    // Predicated region
    $region34: #{tpu_custom_call.1} parent=1 // pred_check
      _
    $region35: #{tpu_custom_call.1} parent=1 // pred_check_branch
      %144 = sbr.rel (0) target = $region37
    $region36: #{tpu_custom_call.1} parent=1 // pred_region
      %145 = dma.done [#allocation6], 32
    $region37: #{tpu_custom_call.1} parent=1 // pred_fallthru
      _
    %146 = vsyncpa [#allocation5], 1
    %147 = vsyncpa [#allocation6], 1

</llo_original>
